<compile_context>
chip_gen: v5e
topology: v5e:2x2
jax: 0.10.0
libtpu: 0.0.40
codegen_flags: <defaults>
</compile_context>

<pallas_src>
import jax
import jax.numpy as jnp
from jax import lax
from jax.experimental import pallas as pl
from jax.experimental.pallas import tpu as pltpu

# ---- model hyper-parameters (small shapes consistent with the module defaults) ----
VOCAB = 8        # len(TOKENS)
PAD_IDX = 0      # TOKENS.index(PAD_TOKEN)
EMB = 8          # emb_dim
HID = 256        # hidden_dim
LAT = 128        # latent_dim
SEQ = 16         # seq_len (max_length)
BATCH = 4
OUT_PAD = 128    # lane-dense padded output width (true output width is SEQ=16)
LN_EPS = 1e-5
BN_EPS = 1e-5
_LOG2V = 3       # VOCAB == 8 (power of two -> shift/mask instead of int div/mod)


def _vmem_spec():
    # whole-array, no grid, resident in VMEM
    return pl.BlockSpec(memory_space=pltpu.MemorySpace.VMEM)


# --------------------------- single fused forward kernel ---------------------------
def ae_fused_kernel(tok_ref, w1_ref, wfold_ref, vec_ref, out_ref):
    tok = tok_ref[...]                                   # (B, S) int32
    B, S = tok.shape
    SV = S * VOCAB                                       # 128 (lane-dense)

    # ---- one-hot (B, S*V) built with one tiny constant-expansion matmul -----------
    # E[s, s*V + v] = 1  =>  tok_exp[b, col] = tok[b, col // V]   (exact in f32)
    rowE = lax.broadcasted_iota(jnp.int32, (S, SV), 0)
    colE = lax.broadcasted_iota(jnp.int32, (S, SV), 1)
    E = (rowE == (colE >> _LOG2V)).astype(jnp.float32)   # (S, SV) compile-time pattern
    tok_exp = jnp.dot(tok.astype(jnp.float32), E,
                      preferred_element_type=jnp.float32)          # (B, SV)
    v_of_col = (lax.broadcasted_iota(jnp.int32, (B, SV), 1)
                & (VOCAB - 1)).astype(jnp.float32)                 # col % VOCAB
    onehot = (tok_exp == v_of_col).astype(jnp.bfloat16)            # (B, SV) bf16 directly

    # ---- packed small vectors (one DMA): rows = b1, bn_g, bn_b, b2_fold, bd2_pad ---
    vec = vec_ref[...]                                             # (8, HID) f32
    b1, bn_g, bn_b, b2 = vec[0:1, :], vec[1:2, :], vec[2:3, :], vec[3:4, :]
    bd2 = vec[4:5, :OUT_PAD]

    # embedding + LayerNorm + flatten + encoder Linear1, all pre-folded into w1
    h = jnp.dot(onehot, w1_ref[...],
                preferred_element_type=jnp.float32) + b1           # (B, HID) f32

    # BatchNorm1d: training-mode (biased) batch statistics, as a freshly built module uses.
    # TODO(synk): PyTorch model.eval() would use running stats instead of batch stats.
    mu = jnp.mean(h, axis=0, keepdims=True)
    hc = h - mu
    var = jnp.mean(hc * hc, axis=0, keepdims=True)
    h = hc * lax.rsqrt(var + BN_EPS) * bn_g + bn_b
    h = jnp.maximum(h, 0.0)                                        # ReLU (f32, VPU)

    # encoder Linear2 fused with decoder ConvTranspose1d #1 centre tap (no nonlinearity
    # between them in the reference), followed by the decoder ReLU
    d = jnp.dot(h.astype(jnp.bfloat16), wfold_ref[:, :HID],
                preferred_element_type=jnp.float32) + b2           # (B, HID)
    d = jnp.maximum(d, 0.0)

    # decoder ConvTranspose1d #2 centre tap, zero-padded to 128 output lanes so this
    # store is lane-dense; AdaptiveAvgPool1d(1) of a length-1 signal is the identity.
    out_ref[...] = jnp.dot(d.astype(jnp.bfloat16), wfold_ref[:, HID:HID + OUT_PAD],
                           preferred_element_type=jnp.float32) + bd2   # (B, 128)


def ae_forward(x_tokens, p):
    B, S = x_tokens.shape
    args = (x_tokens.astype(jnp.int32), p["w1"], p["wfold"], p["vec"])

    flops = 2 * B * (S * (S * VOCAB) + (S * VOCAB) * HID + HID * HID + HID * OUT_PAD)
    bytes_accessed = (B * S * 4 + p["w1"].size * 2 + p["wfold"].size * 2
                      + p["vec"].size * 4 + B * OUT_PAD * 4)

    out = pl.pallas_call(
        ae_fused_kernel,
        out_shape=jax.ShapeDtypeStruct((B, OUT_PAD), jnp.float32),   # lane-dense output
        in_specs=[_vmem_spec() for _ in args],
        out_specs=_vmem_spec(),
        cost_estimate=pl.CostEstimate(flops=flops, transcendentals=HID,
                                      bytes_accessed=bytes_accessed),
    )(*args)
    # TODO(synk): the reference forward passes the 2-D latent straight into ConvTranspose1d
    # (invalid in PyTorch) and out.view(B, seq_len, vocab_size) is only size-consistent when
    # vocab_size == 1; under the standard (B, latent_dim, 1) NCL fix the decoder emits one
    # value per (batch, position), so we return shape (B, SEQ, 1).
    return out[:, :SEQ].reshape(B, SEQ, 1)


# ------------------------------ deterministic parameter init ------------------------------
def init_raw_params(key):
    ks = jax.random.split(key, 9)

    def unif(k, shape, fan_in):
        bound = 1.0 / jnp.sqrt(float(fan_in))
        return jax.random.uniform(k, shape, jnp.float32, -bound, bound)

    emb_table = jax.random.normal(ks[0], (VOCAB, EMB), jnp.float32)
    emb_table = emb_table.at[PAD_IDX].set(0.0)          # padding_idx row zeroed

    # ConvTranspose1d weights: PyTorch layout (in_ch, out_ch, k); only the centre tap
    # (k index == padding) contributes for a length-1 input.
    wd1_full = unif(ks[5], (LAT, HID, 5), LAT * 5)
    wd2_full = unif(ks[7], (HID, SEQ, 3), HID * 3)

    return dict(
        emb_table=emb_table,
        ln_g=jnp.ones((1, EMB), jnp.float32),
        ln_b=jnp.zeros((1, EMB), jnp.float32),
        w1=unif(ks[1], (SEQ * EMB, HID), SEQ * EMB),    # Linear weight stored (in, out)
        b1=unif(ks[2], (1, HID), SEQ * EMB),
        bn_g=jnp.ones((1, HID), jnp.float32),
        bn_b=jnp.zeros((1, HID), jnp.float32),
        w2=unif(ks[3], (HID, LAT), HID),
        b2=unif(ks[4], (1, LAT), HID),
        wd1=wd1_full[:, :, 2],                          # (LAT, HID) centre tap (k=5, pad=2)
        bd1=unif(ks[6], (1, HID), LAT * 5),
        wd2=wd2_full[:, :, 1],                          # (HID, SEQ) centre tap (k=3, pad=1)
        bd2=unif(ks[8], (1, SEQ), HID * 3),
    )


def fold_params(p):
    """Algebraic folds + input packing, done once at init (exact, token-independent)."""
    # LayerNorm folded into the embedding table (pad row: LN(0) == beta, preserved).
    t = p["emb_table"]
    mu = jnp.mean(t, axis=-1, keepdims=True)
    var = jnp.mean((t - mu) ** 2, axis=-1, keepdims=True)
    table_ln = (t - mu) * lax.rsqrt(var + LN_EPS) * p["ln_g"] + p["ln_b"]     # (V, E)

    # embedding + flatten + first Linear  ->  one (S*V, HID) weight
    w1_r = p["w1"].reshape(SEQ, EMB, HID)
    w1_fold = jnp.einsum("ve,seh->svh", table_ln, w1_r).reshape(SEQ * VOCAB, HID)

    # encoder Linear2 fused with decoder ConvTranspose1d #1 centre tap
    w2_fold = p["w2"] @ p["wd1"]                                              # (HID, HID)
    b2_fold = p["b2"] @ p["wd1"] + p["bd1"]                                   # (1, HID)

    # decoder ConvTranspose1d #2 centre tap, zero-padded to 128 lanes (lane-dense output)
    wd2_pad = jnp.zeros((HID, OUT_PAD), jnp.float32).at[:, :SEQ].set(p["wd2"])
    bd2_pad = jnp.zeros((1, OUT_PAD), jnp.float32).at[:, :SEQ].set(p["bd2"])

    # one bf16 weight slab: [:, :HID] = w2_fold, [:, HID:] = wd2_pad
    # TODO(synk): weights quantized once to bf16 (f32 accumulation) -> ~1e-2 rel deviation
    # from an f32 PyTorch reference.
    wfold = jnp.concatenate([w2_fold, wd2_pad], axis=1).astype(jnp.bfloat16)  # (HID, 384)

    # one f32 vector slab (single DMA): rows = b1, bn_g, bn_b, b2_fold, bd2_pad
    vec = jnp.zeros((8, HID), jnp.float32)
    vec = vec.at[0, :].set(p["b1"][0])
    vec = vec.at[1, :].set(p["bn_g"][0])
    vec = vec.at[2, :].set(p["bn_b"][0])
    vec = vec.at[3, :].set(b2_fold[0])
    vec = vec.at[4, :OUT_PAD].set(bd2_pad[0])

    return dict(w1=w1_fold.astype(jnp.bfloat16), wfold=wfold, vec=vec)


if __name__ == "__main__":
    key = jax.random.PRNGKey(0)
    pkey, xkey = jax.random.split(key)
    params = fold_params(init_raw_params(pkey))
    x = jax.random.randint(xkey, (BATCH, SEQ), 0, VOCAB, dtype=jnp.int32)

    out = jax.jit(ae_forward)(x, params)
    jax.block_until_ready(out)
    assert out.shape == (BATCH, SEQ, 1) and out.dtype == jnp.float32
    assert bool(jnp.all(jnp.isfinite(out)))
    print("KERNEL_OK")
</pallas_src>

<mosaic_0001>
module attributes {stable_mosaic.version = 11 : i64} {
  func.func @ae_fused_kernel(%arg0: memref<4x16xi32, #tpu.memory_space<vmem>>, %arg1: memref<128x256xbf16, #tpu.memory_space<vmem>>, %arg2: memref<256x384xbf16, #tpu.memory_space<vmem>>, %arg3: memref<8x256xf32, #tpu.memory_space<vmem>>, %arg4: memref<4x128xf32, #tpu.memory_space<vmem>>) attributes {dimension_semantics = [], scalar_prefetch = 0 : i64, scratch_operands = 0 : i64, tpu.core_type = #tpu.core_type<tc>} {
    %c0 = arith.constant 0 : index
    %c0_0 = arith.constant 0 : index
    %0 = vector.load %arg0[%c0, %c0_0] : memref<4x16xi32, #tpu.memory_space<vmem>>, vector<4x16xi32>
    %1 = tpu.iota {dimensions = array<i32: 0>} : vector<16x128xi32>
    %2 = tpu.iota {dimensions = array<i32: 1>} : vector<16x128xi32>
    %c3_i32 = arith.constant 3 : i32
    %3 = vector.broadcast %c3_i32 : i32 to vector<16x128xi32>
    %4 = arith.shrsi %2, %3 : vector<16x128xi32>
    %5 = arith.cmpi eq, %1, %4 : vector<16x128xi32>
    %6 = arith.extui %5 : vector<16x128xi1> to vector<16x128xi32>
    %7 = arith.sitofp %6 : vector<16x128xi32> to vector<16x128xf32>
    %8 = arith.sitofp %0 : vector<4x16xi32> to vector<4x16xf32>
    %cst = arith.constant dense<0.000000e+00> : vector<4x128xf32>
    %9 = tpu.matmul %8, %7, %cst {dimension_numbers = #tpu.dot_dimension_numbers<[1], [0], [0], [1], [0, 0, 1, 1], [], []>} : vector<4x16xf32>, vector<16x128xf32>, vector<4x128xf32> -> vector<4x128xf32>
    %10 = tpu.iota {dimensions = array<i32: 1>} : vector<4x128xi32>
    %c7_i32 = arith.constant 7 : i32
    %11 = vector.broadcast %c7_i32 : i32 to vector<4x128xi32>
    %12 = arith.andi %10, %11 : vector<4x128xi32>
    %13 = arith.sitofp %12 : vector<4x128xi32> to vector<4x128xf32>
    %14 = arith.cmpf oeq, %9, %13 : vector<4x128xf32>
    %15 = arith.extui %14 : vector<4x128xi1> to vector<4x128xi32>
    %16 = arith.sitofp %15 : vector<4x128xi32> to vector<4x128xf32>
    %17 = arith.truncf %16 : vector<4x128xf32> to vector<4x128xbf16>
    %c0_1 = arith.constant 0 : index
    %c0_2 = arith.constant 0 : index
    %18 = vector.load %arg3[%c0_1, %c0_2] : memref<8x256xf32, #tpu.memory_space<vmem>>, vector<8x256xf32>
    %19 = vector.extract_strided_slice %18 {offsets = [0, 0], sizes = [1, 256], strides = [1, 1]} : vector<8x256xf32> to vector<1x256xf32>
    %20 = vector.extract_strided_slice %18 {offsets = [1, 0], sizes = [1, 256], strides = [1, 1]} : vector<8x256xf32> to vector<1x256xf32>
    %21 = vector.extract_strided_slice %18 {offsets = [2, 0], sizes = [1, 256], strides = [1, 1]} : vector<8x256xf32> to vector<1x256xf32>
    %22 = vector.extract_strided_slice %18 {offsets = [3, 0], sizes = [1, 256], strides = [1, 1]} : vector<8x256xf32> to vector<1x256xf32>
    %23 = vector.extract_strided_slice %18 {offsets = [4, 0], sizes = [1, 128], strides = [1, 1]} : vector<8x256xf32> to vector<1x128xf32>
    %c0_3 = arith.constant 0 : index
    %c0_4 = arith.constant 0 : index
    %24 = vector.load %arg1[%c0_3, %c0_4] : memref<128x256xbf16, #tpu.memory_space<vmem>>, vector<128x256xbf16>
    %cst_5 = arith.constant dense<0.000000e+00> : vector<4x256xf32>
    %25 = tpu.matmul %17, %24, %cst_5 {dimension_numbers = #tpu.dot_dimension_numbers<[1], [0], [0], [1], [0, 0, 1, 1], [], []>} : vector<4x128xbf16>, vector<128x256xbf16>, vector<4x256xf32> -> vector<4x256xf32>
    %26 = vector.broadcast %19 : vector<1x256xf32> to vector<4x256xf32>
    %27 = arith.addf %25, %26 : vector<4x256xf32>
    %cst_6 = arith.constant dense<0.000000e+00> : vector<256xf32>
    %28 = vector.multi_reduction <add>, %27, %cst_6 [0] : vector<4x256xf32> to vector<256xf32>
    %29 = vector.shape_cast %28 : vector<256xf32> to vector<1x256xf32>
    %cst_7 = arith.constant 4.000000e+00 : f32
    %30 = vector.broadcast %cst_7 : f32 to vector<1x256xf32>
    %31 = arith.divf %29, %30 : vector<1x256xf32>
    %32 = vector.broadcast %31 : vector<1x256xf32> to vector<4x256xf32>
    %33 = arith.subf %27, %32 : vector<4x256xf32>
    %34 = arith.mulf %33, %33 : vector<4x256xf32>
    %cst_8 = arith.constant dense<0.000000e+00> : vector<256xf32>
    %35 = vector.multi_reduction <add>, %34, %cst_8 [0] : vector<4x256xf32> to vector<256xf32>
    %36 = vector.shape_cast %35 : vector<256xf32> to vector<1x256xf32>
    %cst_9 = arith.constant 4.000000e+00 : f32
    %37 = vector.broadcast %cst_9 : f32 to vector<1x256xf32>
    %38 = arith.divf %36, %37 : vector<1x256xf32>
    %cst_10 = arith.constant 9.99999974E-6 : f32
    %39 = vector.broadcast %cst_10 : f32 to vector<1x256xf32>
    %40 = arith.addf %38, %39 : vector<1x256xf32>
    %41 = math.rsqrt %40 : vector<1x256xf32>
    %42 = vector.broadcast %41 : vector<1x256xf32> to vector<4x256xf32>
    %43 = arith.mulf %33, %42 : vector<4x256xf32>
    %44 = vector.broadcast %20 : vector<1x256xf32> to vector<4x256xf32>
    %45 = arith.mulf %43, %44 : vector<4x256xf32>
    %46 = vector.broadcast %21 : vector<1x256xf32> to vector<4x256xf32>
    %47 = arith.addf %45, %46 : vector<4x256xf32>
    %cst_11 = arith.constant 0.000000e+00 : f32
    %48 = vector.broadcast %cst_11 : f32 to vector<4x256xf32>
    %49 = arith.maximumf %47, %48 : vector<4x256xf32>
    %50 = arith.truncf %49 : vector<4x256xf32> to vector<4x256xbf16>
    %c0_12 = arith.constant 0 : index
    %c0_13 = arith.constant 0 : index
    %51 = vector.load %arg2[%c0_12, %c0_13] : memref<256x384xbf16, #tpu.memory_space<vmem>>, vector<256x256xbf16>
    %cst_14 = arith.constant dense<0.000000e+00> : vector<4x256xf32>
    %52 = tpu.matmul %50, %51, %cst_14 {dimension_numbers = #tpu.dot_dimension_numbers<[1], [0], [0], [1], [0, 0, 1, 1], [], []>} : vector<4x256xbf16>, vector<256x256xbf16>, vector<4x256xf32> -> vector<4x256xf32>
    %53 = vector.broadcast %22 : vector<1x256xf32> to vector<4x256xf32>
    %54 = arith.addf %52, %53 : vector<4x256xf32>
    %cst_15 = arith.constant 0.000000e+00 : f32
    %55 = vector.broadcast %cst_15 : f32 to vector<4x256xf32>
    %56 = arith.maximumf %54, %55 : vector<4x256xf32>
    %57 = arith.truncf %56 : vector<4x256xf32> to vector<4x256xbf16>
    %c0_16 = arith.constant 0 : index
    %c256 = arith.constant 256 : index
    %58 = vector.load %arg2[%c0_16, %c256] : memref<256x384xbf16, #tpu.memory_space<vmem>>, vector<256x128xbf16>
    %cst_17 = arith.constant dense<0.000000e+00> : vector<4x128xf32>
    %59 = tpu.matmul %57, %58, %cst_17 {dimension_numbers = #tpu.dot_dimension_numbers<[1], [0], [0], [1], [0, 0, 1, 1], [], []>} : vector<4x256xbf16>, vector<256x128xbf16>, vector<4x128xf32> -> vector<4x128xf32>
    %60 = vector.broadcast %23 : vector<1x128xf32> to vector<4x128xf32>
    %61 = arith.addf %59, %60 : vector<4x128xf32>
    %c0_18 = arith.constant 0 : index
    %c0_19 = arith.constant 0 : index
    %62 = vector.load %arg4[%c0_18, %c0_19] : memref<4x128xf32, #tpu.memory_space<vmem>>, vector<4x128xf32>
    tpu.vector_store %arg4[%c0_18, %c0_19], %61 {strides = array<i32>} : memref<4x128xf32, #tpu.memory_space<vmem>>, vector<4x128xf32>,
    return
  }
}

</mosaic_0001>

<llo_original>
// kernel: ae_forward.1
$region0: #{ae_forward.1}
  #allocation0 [shape = 'u32[]', space=smem, size = 0x4, offset = 0x4, fixed_abs, tag = 'smem constant byte address 0x4 - core index']
  #allocation1 [shape = 'u32[72,128]{1,0:T(1,128)}', space=vmem, size = 0x9000, scoped, tag = 'internal scratch']
  %s0 = inlined_call_operand.hbm [shape: s32[4,16], index: 0, kind: input, shape index: {}]
  %s1 = inlined_call_operand.hbm [shape: bf16[128,256], index: 1, kind: input, shape index: {}]
  %s2 = inlined_call_operand.hbm [shape: bf16[256,384], index: 2, kind: input, shape index: {}]
  %s3 = inlined_call_operand.hbm [shape: f32[8,256], index: 3, kind: input, shape index: {}]
  %s4 = inlined_call_operand.hbm [shape: f32[4,128], index: 4, kind: output, shape index: {}]
  %s5 = sld [smem:[#allocation0]]
  $region42: #{ae_forward.1} parent=0
    _
  %s7 = ssub.s32 1, %s5
  %s8 = scalar_select 0, %s7, %s5
  $region1: #{ae_forward.1} parent=0
    #allocation2 [shape = 'u8[2048]{0}', space=vmem, size = 0x800, scoped, tag = 'input window, operand 0, single buffered']
    #allocation3 [shape = 's32[1]{0}', space=sflag, size = 0x4, scoped, tag = 'scoped memory for ae_forward.1']
    #allocation4 [shape = 's32[1]{0}', space=sflag, size = 0x4, scoped, tag = 'scoped memory for ae_forward.1']
    #allocation5 [shape = 'u8[65536]{0}', space=vmem, size = 0x10000, scoped, tag = 'input window, operand 1, single buffered']
    #allocation6 [shape = 's32[1]{0}', space=sflag, size = 0x4, scoped, tag = 'scoped memory for ae_forward.1']
    #allocation7 [shape = 'u8[196608]{0}', space=vmem, size = 0x30000, scoped, tag = 'input window, operand 2, single buffered']
    #allocation8 [shape = 'u8[8192]{0}', space=vmem, size = 0x2000, scoped, tag = 'input window, operand 3, single buffered']
    #allocation9 [shape = 's32[1]{0}', space=sflag, size = 0x4, scoped, tag = 'scoped memory for ae_forward.1']
    #allocation10 [shape = 'u8[2048]{0}', space=vmem, size = 0x800, scoped, tag = 'output window, operand 0, single buffered']
    %9 = vsyncpa [#allocation3], 0
    %10 = vsyncpa [#allocation6], 0
    %11 = vsyncpa [#allocation9], 0
    %12 = vsyncpa [#allocation4], 0
    // Predicated region
    $region2: #{ae_forward.1} parent=1 // pred_check
      _
    $region3: #{ae_forward.1} parent=1 // pred_check_branch
      %14 = sbr.rel (0) target = $region5
    $region4: #{ae_forward.1} parent=1 // pred_region
      %16 = vsyncadd [#allocation3], 0
      %s18 = sshll.u32 %s0, 4
      %s19 = int_to_ptr.hbm [resolvable:$true] %s18
      %s20 = sshll.u32 [#allocation2], 4
      %s21 = int_to_ptr.vmem [resolvable:$true] %s20
      %23 = dma.hbm_to_vmem [thread:$0]  %s19, 64, %s21, [#allocation3]
    $region5: #{ae_forward.1} parent=1 // pred_fallthru
      _
    // Predicated region
    $region6: #{ae_forward.1} parent=1 // pred_check
      _
    $region7: #{ae_forward.1} parent=1 // pred_check_branch
      %25 = sbr.rel (0) target = $region9
    $region8: #{ae_forward.1} parent=1 // pred_region
      %27 = vsyncadd [#allocation6], 0
      %s28 = sshll.u32 %s1, 4
      %s29 = int_to_ptr.hbm [resolvable:$true] %s28
      %s30 = sshll.u32 [#allocation5], 4
      %s31 = int_to_ptr.vmem [resolvable:$true] %s30
      %36 = dma.hbm_to_vmem [thread:$0]  %s29, 2048, %s31, [#allocation6], 128, 128, 8
    $region9: #{ae_forward.1} parent=1 // pred_fallthru
      _
    // Predicated region
    $region10: #{ae_forward.1} parent=1 // pred_check
      _
    $region11: #{ae_forward.1} parent=1 // pred_check_branch
      %38 = sbr.rel (0) target = $region13
    $region12: #{ae_forward.1} parent=1 // pred_region
      %40 = vsyncadd [#allocation6], 0
      %s41 = sshll.u32 %s2, 4
      %s42 = int_to_ptr.hbm [resolvable:$true] %s41
      %s43 = sshll.u32 [#allocation7], 4
      %s44 = int_to_ptr.vmem [resolvable:$true] %s43
      %49 = dma.hbm_to_vmem [thread:$0]  %s42, 6144, %s44, [#allocation6], 192, 192, 12
    $region13: #{ae_forward.1} parent=1 // pred_fallthru
      _
    // Predicated region
    $region14: #{ae_forward.1} parent=1 // pred_check
      _
    $region15: #{ae_forward.1} parent=1 // pred_check_branch
      %51 = sbr.rel (0) target = $region17
    $region16: #{ae_forward.1} parent=1 // pred_region
      %53 = vsyncadd [#allocation9], 0
      %s55 = sshll.u32 %s3, 4
      %s56 = int_to_ptr.hbm [resolvable:$true] %s55
      %s57 = sshll.u32 [#allocation8], 4
      %s58 = int_to_ptr.vmem [resolvable:$true] %s57
      %60 = dma.hbm_to_vmem [thread:$0]  %s56, 256, %s58, [#allocation9]
    $region17: #{ae_forward.1} parent=1 // pred_fallthru
      _
    // Predicated region
    $region18: #{ae_forward.1} parent=1 // pred_check
      _
    $region19: #{ae_forward.1} parent=1 // pred_check_branch
      %62 = sbr.rel (0) target = $region21
    $region20: #{ae_forward.1} parent=1 // pred_region
      %64 = dma.done [#allocation3], 64
    $region21: #{ae_forward.1} parent=1 // pred_fallthru
      _
    // Predicated region
    $region22: #{ae_forward.1} parent=1 // pred_check
      _
    $region23: #{ae_forward.1} parent=1 // pred_check_branch
      %66 = sbr.rel (0) target = $region25
    $region24: #{ae_forward.1} parent=1 // pred_region
      %68 = dma.done [#allocation6], 2048
    $region25: #{ae_forward.1} parent=1 // pred_fallthru
      _
    // Predicated region
    $region26: #{ae_forward.1} parent=1 // pred_check
      _
    $region27: #{ae_forward.1} parent=1 // pred_check_branch
      %70 = sbr.rel (0) target = $region29
    $region28: #{ae_forward.1} parent=1 // pred_region
      %72 = dma.done [#allocation6], 6144
    $region29: #{ae_forward.1} parent=1 // pred_fallthru
      _
    // Predicated region
    $region30: #{ae_forward.1} parent=1 // pred_check
      _
    $region31: #{ae_forward.1} parent=1 // pred_check_branch
      %74 = sbr.rel (0) target = $region33
    $region32: #{ae_forward.1} parent=1 // pred_region
      %76 = dma.done [#allocation9], 256
    $region33: #{ae_forward.1} parent=1 // pred_fallthru
      _
    %v77 = vld [vmem:[#allocation2] sm:$0xf]
    %v78 = vlaneseq
    %v79 = vshrl.u32 %v78, 7
    %v80 = vadd.s32 %v79, 8
    %v81 = vlaneseq
    %v82 = vand.u32 %v81, 127
    %v83 = vshra.s32 %v82, 3
    %vm84 = vcmp.eq.s32.totalorder %v79, %v83
    %vm85 = vcmp.eq.s32.totalorder %v80, %v83
    %v86 = vsel %vm84, 1, 0
    %v87 = vsel %vm85, 1, 0
    %v88 = vcvt.s32.f32 %v86
    %v89 = vcvt.s32.f32 %v87
    %v90 = vcvt.s32.f32 %v77
    %vm91 = vcmask 130048
    %v93 = vsel %vm91, %v90, 0
    %95 = vmatpush.msra.mxu0 0.0
    %96 = vmatpush.msra.mxu0 0.0
    %97 = vmatpush.msra.mxu0 0.0
    %98 = vmatpush.msra.mxu0 0.0
    %99 = vmatpush.msra.mxu0 0.0
    %100 = vmatpush.msra.mxu0 0.0
    %101 = vmatpush.msra.mxu0 0.0
    %102 = vmatpush.msra.mxu0 0.0
    %103 = vmatpush.msra.mxu0 0.0
    %104 = vmatpush.msra.mxu0 0.0
    %105 = vmatpush.msra.mxu0 0.0
    %106 = vmatpush.msra.mxu0 0.0
    %107 = vmatpush.msra.mxu0 0.0
    %108 = vmatpush.msra.mxu0 0.0
    %109 = vmatpush.msra.mxu0 %v89
    %110 = vmatpush.msra.mxu0 %v88
    %111 = vmatmul.f32.gmra.mxu0 %v93
    %v112 = vpop.f32.mrf.mxu0
    %v113 = vadd.f32 0.0, %v112
    %114 = vdwg.mxu0
    %v115 = vand.u32 %v82, 7
    %v116 = vcvt.s32.f32 %v115
    %vm117 = vcmp.eq.f32.partialorder %v113, %v116
    %v118 = vsel %vm117, 1, 0
    %v119 = vcvt.s32.f32 %v118
    %v120 = vpack.c.bf16 %v119, %v119
    %v121 = vld [vmem:[#allocation8] sm:$0xff]
    %v122 = vld [vmem:[#allocation8 + $0x8] sm:$0xff]
    %v123 = vld [vmem:[#allocation5] sm:$0xff]
    %v124 = vld [vmem:[#allocation5 + $0x8] sm:$0xff]
    %v125 = vld [vmem:[#allocation5 + $0x10] sm:$0xff]
    %v126 = vld [vmem:[#allocation5 + $0x18] sm:$0xff]
    %v127 = vld [vmem:[#allocation5 + $0x20] sm:$0xff]
    %v128 = vld [vmem:[#allocation5 + $0x28] sm:$0xff]
    %v129 = vld [vmem:[#allocation5 + $0x30] sm:$0xff]
    %v130 = vld [vmem:[#allocation5 + $0x38] sm:$0xff]
    %v131 = vld [vmem:[#allocation5 + $0x40] sm:$0xff]
    %v132 = vld [vmem:[#allocation5 + $0x48] sm:$0xff]
    %v133 = vld [vmem:[#allocation5 + $0x50] sm:$0xff]
    %v134 = vld [vmem:[#allocation5 + $0x58] sm:$0xff]
    %v135 = vld [vmem:[#allocation5 + $0x60] sm:$0xff]
    %v136 = vld [vmem:[#allocation5 + $0x68] sm:$0xff]
    %v137 = vld [vmem:[#allocation5 + $0x70] sm:$0xff]
    %v138 = vld [vmem:[#allocation5 + $0x78] sm:$0xff]
    %v139 = vperm.slane %v121, 0
    %v140 = vperm.slane %v122, 0
    %v157 = vunpack.c.l.b16 %v123
    %v158 = vunpack.c.h.b16 %v123
    %v159 = vunpack.c.l.b16 %v124
    %v160 = vunpack.c.h.b16 %v124
    %v161 = vunpack.c.l.b16 %v125
    %v162 = vunpack.c.h.b16 %v125
    %v163 = vunpack.c.l.b16 %v126
    %v164 = vunpack.c.h.b16 %v126
    %v165 = vunpack.c.l.b16 %v127
    %v166 = vunpack.c.h.b16 %v127
    %v167 = vunpack.c.l.b16 %v128
    %v168 = vunpack.c.h.b16 %v128
    %v169 = vunpack.c.l.b16 %v129
    %v170 = vunpack.c.h.b16 %v129
    %v171 = vunpack.c.l.b16 %v130
    %v172 = vunpack.c.h.b16 %v130
    %v173 = vunpack.c.l.b16 %v131
    %v174 = vunpack.c.h.b16 %v131
    %v175 = vunpack.c.l.b16 %v132
    %v176 = vunpack.c.h.b16 %v132
    %v177 = vunpack.c.l.b16 %v133
    %v178 = vunpack.c.h.b16 %v133
    %v179 = vunpack.c.l.b16 %v134
    %v180 = vunpack.c.h.b16 %v134
    %v181 = vunpack.c.l.b16 %v135
    %v182 = vunpack.c.h.b16 %v135
    %v183 = vunpack.c.l.b16 %v136
    %v184 = vunpack.c.h.b16 %v136
    %v185 = vunpack.c.l.b16 %v137
    %v186 = vunpack.c.h.b16 %v137
    %v187 = vunpack.c.l.b16 %v138
    %v188 = vunpack.c.h.b16 %v138
    %v189 = vpack.c.b16 %v159, %v157
    %v190 = vpack.c.b16 %v160, %v158
    %v191 = vpack.c.b16 %v163, %v161
    %v192 = vpack.c.b16 %v164, %v162
    %v193 = vpack.c.b16 %v167, %v165
    %v194 = vpack.c.b16 %v168, %v166
    %v195 = vpack.c.b16 %v171, %v169
    %v196 = vpack.c.b16 %v172, %v170
    %v197 = vpack.c.b16 %v175, %v173
    %v198 = vpack.c.b16 %v176, %v174
    %v199 = vpack.c.b16 %v179, %v177
    %v200 = vpack.c.b16 %v180, %v178
    %v201 = vpack.c.b16 %v183, %v181
    %v202 = vpack.c.b16 %v184, %v182
    %v203 = vpack.c.b16 %v187, %v185
    %v204 = vpack.c.b16 %v188, %v186
    %221 = vmatpush.bf16.msra.mxu0 %v203
    %222 = vmatpush.bf16.msra.mxu0 %v201
    %223 = vmatpush.bf16.msra.mxu0 %v199
    %224 = vmatpush.bf16.msra.mxu0 %v197
    %225 = vmatpush.bf16.msra.mxu0 %v195
    %226 = vmatpush.bf16.msra.mxu0 %v193
    %227 = vmatpush.bf16.msra.mxu0 %v191
    %228 = vmatpush.bf16.msra.mxu0 %v189
    %229 = vmatmul.bf16.gmra.mxu0 %v120
    %v230 = vpop.f32.mrf.mxu0
    %v231 = vadd.f32 %v139, %v230
    %v232 = vpop.f32.mrf.mxu0
    %233 = vdwg.mxu0
    %234 = vmatpush.bf16.msra.mxu0 %v204
    %235 = vmatpush.bf16.msra.mxu0 %v202
    %236 = vmatpush.bf16.msra.mxu0 %v200
    %237 = vmatpush.bf16.msra.mxu0 %v198
    %238 = vmatpush.bf16.msra.mxu0 %v196
    %239 = vmatpush.bf16.msra.mxu0 %v194
    %240 = vmatpush.bf16.msra.mxu0 %v192
    %241 = vmatpush.bf16.msra.mxu0 %v190
    %242 = vmatmul.bf16.gmra.mxu0 %v120
    %v243 = vpop.f32.mrf.mxu0
    %v244 = vadd.f32 %v140, %v243
    %v245 = vpop.f32.mrf.mxu0
    %246 = vdwg.mxu0
    %vm247 = vcmask 1043456
    %v248 = vsel %vm247, %v231, 0.0
    %v249 = vrot.slane %v248, 4
    %v250 = vadd.f32 %v248, %v249
    %v251 = vrot.slane %v250, 2
    %v252 = vadd.f32 %v250, %v251
    %v253 = vrot.slane %v252, 1
    %v254 = vadd.f32 %v252, %v253
    %v255 = vsel %vm247, %v244, 0.0
    %v256 = vrot.slane %v255, 4
    %v257 = vadd.f32 %v255, %v256
    %v258 = vrot.slane %v257, 2
    %v259 = vadd.f32 %v257, %v258
    %v260 = vrot.slane %v259, 1
    %v261 = vadd.f32 %v259, %v260
    %v262 = vrcp.pop 4.0
    %v263 = vmul.f32 4.0, %v262
    %v264 = vsub.f32 1.0, %v263
    %v265 = vmul.f32 %v262, %v264
    %v266 = vadd.f32 %v262, %v265
    %vm267 = vweird.f32 %v262
    %v268 = vsel %vm267, %v262, %v266
    %v269 = vmul.f32 %v254, %v268
    %v270 = vmul.f32 %v261, %v268
    %v271 = vsub.f32 %v231, %v269
    %v272 = vsub.f32 %v244, %v270
    %v273 = vmul.f32 %v271, %v271
    %v274 = vmul.f32 %v272, %v272
    %v275 = vsel %vm247, %v273, 0.0
    %v276 = vrot.slane %v275, 4
    %v277 = vadd.f32 %v275, %v276
    %v278 = vrot.slane %v277, 2
    %v279 = vadd.f32 %v277, %v278
    %v280 = vrot.slane %v279, 1
    %v281 = vadd.f32 %v279, %v280
    %v282 = vsel %vm247, %v274, 0.0
    %v283 = vrot.slane %v282, 4
    %v284 = vadd.f32 %v282, %v283
    %v285 = vrot.slane %v284, 2
    %v286 = vadd.f32 %v284, %v285
    %v287 = vrot.slane %v286, 1
    %v288 = vadd.f32 %v286, %v287
    %v289 = vmul.f32 %v281, %v268
    %v290 = vmul.f32 %v288, %v268
    %v291 = vadd.f32 %v289, 1e-05
    %v292 = vadd.f32 %v290, 1e-05
    %v293 = vrsqrt.pop %v291
    %v294 = vmul.f32 %v293, %v291
    %v295 = vmul.f32 %v294, %v293
    %v296 = vmul.f32 0.5, %v295
    %v297 = vsub.f32 1.5, %v296
    %v298 = vmul.f32 %v293, %v297
    %vm299 = vweird.f32 %v291
    %vm300 = vweird.f32 %v293
    %vm301 = vmor %vm299, %vm300
    %v302 = vsel %vm301, %v293, %v298
    %v303 = vrsqrt.pop %v292
    %v304 = vmul.f32 %v303, %v292
    %v305 = vmul.f32 %v304, %v303
    %v306 = vmul.f32 0.5, %v305
    %v307 = vsub.f32 1.5, %v306
    %v308 = vmul.f32 %v303, %v307
    %vm309 = vweird.f32 %v292
    %vm310 = vweird.f32 %v303
    %vm311 = vmor %vm309, %vm310
    %v312 = vsel %vm311, %v303, %v308
    %v313 = vmul.f32 %v271, %v302
    %v314 = vmul.f32 %v272, %v312
    %v315 = vperm.slane %v121, 1
    %v316 = vperm.slane %v122, 1
    %v317 = vmul.f32 %v313, %v315
    %v318 = vmul.f32 %v314, %v316
    %v319 = vperm.slane %v121, 2
    %v320 = vperm.slane %v122, 2
    %v321 = vadd.f32 %v317, %v319
    %v322 = vadd.f32 %v318, %v320
    %v323 = vmax.f32 %v321, 0.0
    %v324 = vmax.f32 %v322, 0.0
    %v325 = vpack.c.bf16 %v323, %v323
    %v326 = vpack.c.bf16 %v324, %v324
    %v327 = vld [vmem:[#allocation7] sm:$0xff]
    %v328 = vld [vmem:[#allocation7 + $0xc] sm:$0xff]
    %v329 = vld [vmem:[#allocation7 + $0x18] sm:$0xff]
    %v330 = vld [vmem:[#allocation7 + $0x24] sm:$0xff]
    %v331 = vld [vmem:[#allocation7 + $0x30] sm:$0xff]
    %v332 = vld [vmem:[#allocation7 + $0x3c] sm:$0xff]
    %v333 = vld [vmem:[#allocation7 + $0x48] sm:$0xff]
    %v334 = vld [vmem:[#allocation7 + $0x54] sm:$0xff]
    %v335 = vld [vmem:[#allocation7 + $0x60] sm:$0xff]
    %v336 = vld [vmem:[#allocation7 + $0x6c] sm:$0xff]
    %v337 = vld [vmem:[#allocation7 + $0x78] sm:$0xff]
    %v338 = vld [vmem:[#allocation7 + $0x84] sm:$0xff]
    %v339 = vld [vmem:[#allocation7 + $0x90] sm:$0xff]
    %v340 = vld [vmem:[#allocation7 + $0x9c] sm:$0xff]
    %v341 = vld [vmem:[#allocation7 + $0xa8] sm:$0xff]
    %v342 = vld [vmem:[#allocation7 + $0xb4] sm:$0xff]
    %v343 = vld [vmem:[#allocation7 + $0xc0] sm:$0xff]
    %v344 = vld [vmem:[#allocation7 + $0xcc] sm:$0xff]
    %v345 = vld [vmem:[#allocation7 + $0xd8] sm:$0xff]
    %v346 = vld [vmem:[#allocation7 + $0xe4] sm:$0xff]
    %v347 = vld [vmem:[#allocation7 + $0xf0] sm:$0xff]
    %v348 = vld [vmem:[#allocation7 + $0xfc] sm:$0xff]
    %v349 = vld [vmem:[#allocation7 + $0x108] sm:$0xff]
    %v350 = vld [vmem:[#allocation7 + $0x114] sm:$0xff]
    %v351 = vld [vmem:[#allocation7 + $0x120] sm:$0xff]
    %v352 = vld [vmem:[#allocation7 + $0x12c] sm:$0xff]
    %v353 = vld [vmem:[#allocation7 + $0x138] sm:$0xff]
    %v354 = vld [vmem:[#allocation7 + $0x144] sm:$0xff]
    %v355 = vld [vmem:[#allocation7 + $0x150] sm:$0xff]
    %v356 = vld [vmem:[#allocation7 + $0x15c] sm:$0xff]
    %v357 = vld [vmem:[#allocation7 + $0x168] sm:$0xff]
    %v358 = vld [vmem:[#allocation7 + $0x174] sm:$0xff]
    %v359 = vperm.slane %v121, 3
    %v360 = vperm.slane %v122, 3
    %v393 = vunpack.c.l.b16 %v327
    %v394 = vunpack.c.h.b16 %v327
    %v395 = vunpack.c.l.b16 %v328
    %v396 = vunpack.c.h.b16 %v328
    %v397 = vunpack.c.l.b16 %v329
    %v398 = vunpack.c.h.b16 %v329
    %v399 = vunpack.c.l.b16 %v330
    %v400 = vunpack.c.h.b16 %v330
    %v401 = vunpack.c.l.b16 %v331
    %v402 = vunpack.c.h.b16 %v331
    %v403 = vunpack.c.l.b16 %v332
    %v404 = vunpack.c.h.b16 %v332
    %v405 = vunpack.c.l.b16 %v333
    %v406 = vunpack.c.h.b16 %v333
    %v407 = vunpack.c.l.b16 %v334
    %v408 = vunpack.c.h.b16 %v334
    %v409 = vunpack.c.l.b16 %v335
    %v410 = vunpack.c.h.b16 %v335
    %v411 = vunpack.c.l.b16 %v336
    %v412 = vunpack.c.h.b16 %v336
    %v413 = vunpack.c.l.b16 %v337
    %v414 = vunpack.c.h.b16 %v337
    %v415 = vunpack.c.l.b16 %v338
    %v416 = vunpack.c.h.b16 %v338
    %v417 = vunpack.c.l.b16 %v339
    %v418 = vunpack.c.h.b16 %v339
    %v419 = vunpack.c.l.b16 %v340
    %v420 = vunpack.c.h.b16 %v340
    %v421 = vunpack.c.l.b16 %v341
    %v422 = vunpack.c.h.b16 %v341
    %v423 = vunpack.c.l.b16 %v342
    %v424 = vunpack.c.h.b16 %v342
    %v425 = vunpack.c.l.b16 %v343
    %v426 = vunpack.c.h.b16 %v343
    %v427 = vunpack.c.l.b16 %v344
    %v428 = vunpack.c.h.b16 %v344
    %v429 = vunpack.c.l.b16 %v345
    %v430 = vunpack.c.h.b16 %v345
    %v431 = vunpack.c.l.b16 %v346
    %v432 = vunpack.c.h.b16 %v346
    %v433 = vunpack.c.l.b16 %v347
    %v434 = vunpack.c.h.b16 %v347
    %v435 = vunpack.c.l.b16 %v348
    %v436 = vunpack.c.h.b16 %v348
    %v437 = vunpack.c.l.b16 %v349
    %v438 = vunpack.c.h.b16 %v349
    %v439 = vunpack.c.l.b16 %v350
    %v440 = vunpack.c.h.b16 %v350
    %v441 = vunpack.c.l.b16 %v351
    %v442 = vunpack.c.h.b16 %v351
    %v443 = vunpack.c.l.b16 %v352
    %v444 = vunpack.c.h.b16 %v352
    %v445 = vunpack.c.l.b16 %v353
    %v446 = vunpack.c.h.b16 %v353
    %v447 = vunpack.c.l.b16 %v354
    %v448 = vunpack.c.h.b16 %v354
    %v449 = vunpack.c.l.b16 %v355
    %v450 = vunpack.c.h.b16 %v355
    %v451 = vunpack.c.l.b16 %v356
    %v452 = vunpack.c.h.b16 %v356
    %v453 = vunpack.c.l.b16 %v357
    %v454 = vunpack.c.h.b16 %v357
    %v455 = vunpack.c.l.b16 %v358
    %v456 = vunpack.c.h.b16 %v358
    %v457 = vpack.c.b16 %v395, %v393
    %v458 = vpack.c.b16 %v396, %v394
    %v459 = vpack.c.b16 %v399, %v397
    %v460 = vpack.c.b16 %v400, %v398
    %v461 = vpack.c.b16 %v403, %v401
    %v462 = vpack.c.b16 %v404, %v402
    %v463 = vpack.c.b16 %v407, %v405
    %v464 = vpack.c.b16 %v408, %v406
    %v465 = vpack.c.b16 %v411, %v409
    %v466 = vpack.c.b16 %v412, %v410
    %v467 = vpack.c.b16 %v415, %v413
    %v468 = vpack.c.b16 %v416, %v414
    %v469 = vpack.c.b16 %v419, %v417
    %v470 = vpack.c.b16 %v420, %v418
    %v471 = vpack.c.b16 %v423, %v421
    %v472 = vpack.c.b16 %v424, %v422
    %v473 = vpack.c.b16 %v427, %v425
    %v474 = vpack.c.b16 %v428, %v426
    %v475 = vpack.c.b16 %v431, %v429
    %v476 = vpack.c.b16 %v432, %v430
    %v477 = vpack.c.b16 %v435, %v433
    %v478 = vpack.c.b16 %v436, %v434
    %v479 = vpack.c.b16 %v439, %v437
    %v480 = vpack.c.b16 %v440, %v438
    %v481 = vpack.c.b16 %v443, %v441
    %v482 = vpack.c.b16 %v444, %v442
    %v483 = vpack.c.b16 %v447, %v445
    %v484 = vpack.c.b16 %v448, %v446
    %v485 = vpack.c.b16 %v451, %v449
    %v486 = vpack.c.b16 %v452, %v450
    %v487 = vpack.c.b16 %v455, %v453
    %v488 = vpack.c.b16 %v456, %v454
    %521 = vmatpush.bf16.msra.mxu0 %v471
    %522 = vmatpush.bf16.msra.mxu0 %v469
    %523 = vmatpush.bf16.msra.mxu0 %v467
    %524 = vmatpush.bf16.msra.mxu0 %v465
    %525 = vmatpush.bf16.msra.mxu0 %v463
    %526 = vmatpush.bf16.msra.mxu0 %v461
    %527 = vmatpush.bf16.msra.mxu0 %v459
    %528 = vmatpush.bf16.msra.mxu0 %v457
    %529 = vmatmul.bf16.gmra.mxu0 %v325
    %v530 = vpop.f32.mrf.mxu0
    %v531 = vadd.f32 %v359, %v530
    %v532 = vpop.f32.mrf.mxu0
    %533 = vdwg.mxu0
    %534 = vmatpush.bf16.msra.mxu0 %v487
    %535 = vmatpush.bf16.msra.mxu0 %v485
    %536 = vmatpush.bf16.msra.mxu0 %v483
    %537 = vmatpush.bf16.msra.mxu0 %v481
    %538 = vmatpush.bf16.msra.mxu0 %v479
    %539 = vmatpush.bf16.msra.mxu0 %v477
    %540 = vmatpush.bf16.msra.mxu0 %v475
    %541 = vmatpush.bf16.msra.mxu0 %v473
    %542 = vmatmul.bf16.gmra.mxu0 %v326
    %v543 = vpop.f32.mrf.mxu0
    %v544 = vadd.f32 %v531, %v543
    %v545 = vpop.f32.mrf.mxu0
    %546 = vdwg.mxu0
    %547 = vmatpush.bf16.msra.mxu0 %v472
    %548 = vmatpush.bf16.msra.mxu0 %v470
    %549 = vmatpush.bf16.msra.mxu0 %v468
    %550 = vmatpush.bf16.msra.mxu0 %v466
    %551 = vmatpush.bf16.msra.mxu0 %v464
    %552 = vmatpush.bf16.msra.mxu0 %v462
    %553 = vmatpush.bf16.msra.mxu0 %v460
    %554 = vmatpush.bf16.msra.mxu0 %v458
    %555 = vmatmul.bf16.gmra.mxu0 %v325
    %v556 = vpop.f32.mrf.mxu0
    %v557 = vadd.f32 %v360, %v556
    %v558 = vpop.f32.mrf.mxu0
    %559 = vdwg.mxu0
    %560 = vmatpush.bf16.msra.mxu0 %v488
    %561 = vmatpush.bf16.msra.mxu0 %v486
    %562 = vmatpush.bf16.msra.mxu0 %v484
    %563 = vmatpush.bf16.msra.mxu0 %v482
    %564 = vmatpush.bf16.msra.mxu0 %v480
    %565 = vmatpush.bf16.msra.mxu0 %v478
    %566 = vmatpush.bf16.msra.mxu0 %v476
    %567 = vmatpush.bf16.msra.mxu0 %v474
    %568 = vmatmul.bf16.gmra.mxu0 %v326
    %v569 = vpop.f32.mrf.mxu0
    %v570 = vadd.f32 %v557, %v569
    %v571 = vpop.f32.mrf.mxu0
    %572 = vdwg.mxu0
    %v573 = vmax.f32 %v544, 0.0
    %v574 = vmax.f32 %v570, 0.0
    %v575 = vpack.c.bf16 %v573, %v573
    %v576 = vpack.c.bf16 %v574, %v574
    %v577 = vld [vmem:[#allocation7 + $0x8] sm:$0xf]
    %v578 = vld [vmem:[#allocation7 + $0x14] sm:$0xf]
    %v579 = vld [vmem:[#allocation7 + $0x20] sm:$0xf]
    %v580 = vld [vmem:[#allocation7 + $0x2c] sm:$0xf]
    %v581 = vld [vmem:[#allocation7 + $0x38] sm:$0xf]
    %v582 = vld [vmem:[#allocation7 + $0x44] sm:$0xf]
    %v583 = vld [vmem:[#allocation7 + $0x50] sm:$0xf]
    %v584 = vld [vmem:[#allocation7 + $0x5c] sm:$0xf]
    %v585 = vld [vmem:[#allocation7 + $0x68] sm:$0xf]
    %v586 = vld [vmem:[#allocation7 + $0x74] sm:$0xf]
    %v587 = vld [vmem:[#allocation7 + $0x80] sm:$0xf]
    %v588 = vld [vmem:[#allocation7 + $0x8c] sm:$0xf]
    %v589 = vld [vmem:[#allocation7 + $0x98] sm:$0xf]
    %v590 = vld [vmem:[#allocation7 + $0xa4] sm:$0xf]
    %v591 = vld [vmem:[#allocation7 + $0xb0] sm:$0xf]
    %v592 = vld [vmem:[#allocation7 + $0xbc] sm:$0xf]
    %v593 = vld [vmem:[#allocation7 + $0xc8] sm:$0xf]
    %v594 = vld [vmem:[#allocation7 + $0xd4] sm:$0xf]
    %v595 = vld [vmem:[#allocation7 + $0xe0] sm:$0xf]
    %v596 = vld [vmem:[#allocation7 + $0xec] sm:$0xf]
    %v597 = vld [vmem:[#allocation7 + $0xf8] sm:$0xf]
    %v598 = vld [vmem:[#allocation7 + $0x104] sm:$0xf]
    %v599 = vld [vmem:[#allocation7 + $0x110] sm:$0xf]
    %v600 = vld [vmem:[#allocation7 + $0x11c] sm:$0xf]
    %v601 = vld [vmem:[#allocation7 + $0x128] sm:$0xf]
    %v602 = vld [vmem:[#allocation7 + $0x134] sm:$0xf]
    %v603 = vld [vmem:[#allocation7 + $0x140] sm:$0xf]
    %v604 = vld [vmem:[#allocation7 + $0x14c] sm:$0xf]
    %v605 = vld [vmem:[#allocation7 + $0x158] sm:$0xf]
    %v606 = vld [vmem:[#allocation7 + $0x164] sm:$0xf]
    %v607 = vld [vmem:[#allocation7 + $0x170] sm:$0xf]
    %v608 = vld [vmem:[#allocation7 + $0x17c] sm:$0xf]
    %v609 = vperm.slane %v121, 4
    %v642 = vunpack.c.l.b16 %v577
    %v643 = vunpack.c.l.b16 %v578
    %v644 = vunpack.c.l.b16 %v579
    %v645 = vunpack.c.l.b16 %v580
    %v646 = vunpack.c.l.b16 %v581
    %v647 = vunpack.c.l.b16 %v582
    %v648 = vunpack.c.l.b16 %v583
    %v649 = vunpack.c.l.b16 %v584
    %v650 = vunpack.c.l.b16 %v585
    %v651 = vunpack.c.l.b16 %v586
    %v652 = vunpack.c.l.b16 %v587
    %v653 = vunpack.c.l.b16 %v588
    %v654 = vunpack.c.l.b16 %v589
    %v655 = vunpack.c.l.b16 %v590
    %v656 = vunpack.c.l.b16 %v591
    %v657 = vunpack.c.l.b16 %v592
    %v658 = vunpack.c.l.b16 %v593
    %v659 = vunpack.c.l.b16 %v594
    %v660 = vunpack.c.l.b16 %v595
    %v661 = vunpack.c.l.b16 %v596
    %v662 = vunpack.c.l.b16 %v597
    %v663 = vunpack.c.l.b16 %v598
    %v664 = vunpack.c.l.b16 %v599
    %v665 = vunpack.c.l.b16 %v600
    %v666 = vunpack.c.l.b16 %v601
    %v667 = vunpack.c.l.b16 %v602
    %v668 = vunpack.c.l.b16 %v603
    %v669 = vunpack.c.l.b16 %v604
    %v670 = vunpack.c.l.b16 %v605
    %v671 = vunpack.c.l.b16 %v606
    %v672 = vunpack.c.l.b16 %v607
    %v673 = vunpack.c.l.b16 %v608
    %v674 = vpack.c.b16 %v643, %v642
    %v675 = vpack.c.b16 %v645, %v644
    %v676 = vpack.c.b16 %v647, %v646
    %v677 = vpack.c.b16 %v649, %v648
    %v678 = vpack.c.b16 %v651, %v650
    %v679 = vpack.c.b16 %v653, %v652
    %v680 = vpack.c.b16 %v655, %v654
    %v681 = vpack.c.b16 %v657, %v656
    %v682 = vpack.c.b16 %v659, %v658
    %v683 = vpack.c.b16 %v661, %v660
    %v684 = vpack.c.b16 %v663, %v662
    %v685 = vpack.c.b16 %v665, %v664
    %v686 = vpack.c.b16 %v667, %v666
    %v687 = vpack.c.b16 %v669, %v668
    %v688 = vpack.c.b16 %v671, %v670
    %v689 = vpack.c.b16 %v673, %v672
    %706 = vmatpush.bf16.msra.mxu0 %v681
    %707 = vmatpush.bf16.msra.mxu0 %v680
    %708 = vmatpush.bf16.msra.mxu0 %v679
    %709 = vmatpush.bf16.msra.mxu0 %v678
    %710 = vmatpush.bf16.msra.mxu0 %v677
    %711 = vmatpush.bf16.msra.mxu0 %v676
    %712 = vmatpush.bf16.msra.mxu0 %v675
    %713 = vmatpush.bf16.msra.mxu0 %v674
    %714 = vmatmul.bf16.gmra.mxu0 %v575
    %v715 = vpop.f32.mrf.mxu0
    %v716 = vadd.f32 %v609, %v715
    %v717 = vpop.f32.mrf.mxu0
    %718 = vdwg.mxu0
    %719 = vmatpush.bf16.msra.mxu0 %v689
    %720 = vmatpush.bf16.msra.mxu0 %v688
    %721 = vmatpush.bf16.msra.mxu0 %v687
    %722 = vmatpush.bf16.msra.mxu0 %v686
    %723 = vmatpush.bf16.msra.mxu0 %v685
    %724 = vmatpush.bf16.msra.mxu0 %v684
    %725 = vmatpush.bf16.msra.mxu0 %v683
    %726 = vmatpush.bf16.msra.mxu0 %v682
    %727 = vmatmul.bf16.gmra.mxu0 %v576
    %v728 = vpop.f32.mrf.mxu0
    %v729 = vadd.f32 %v716, %v728
    %v730 = vpop.f32.mrf.mxu0
    %731 = vdwg.mxu0
    %732 = vst [vmem:[#allocation10] sm:$0xf] %v729
    // Predicated region
    $region34: #{ae_forward.1} parent=1 // pred_check
      _
    $region35: #{ae_forward.1} parent=1 // pred_check_branch
      %734 = sbr.rel (0) target = $region37
    $region36: #{ae_forward.1} parent=1 // pred_region
      %736 = vsyncadd [#allocation4], 0
      %s738 = sshll.u32 [#allocation10], 4
      %s739 = int_to_ptr.vmem [resolvable:$true] %s738
      %s740 = sshll.u32 %s4, 4
      %s741 = int_to_ptr.hbm [resolvable:$true] %s740
      %743 = dma.vmem_to_hbm [thread:$0]  %s739, 64, %s741, [#allocation4]
    $region37: #{ae_forward.1} parent=1 // pred_fallthru
      _
    // Predicated region
    $region38: #{ae_forward.1} parent=1 // pred_check
      _
    $region39: #{ae_forward.1} parent=1 // pred_check_branch
      %745 = sbr.rel (0) target = $region41
    $region40: #{ae_forward.1} parent=1 // pred_region
      %747 = dma.done [#allocation4], 64
    $region41: #{ae_forward.1} parent=1 // pred_fallthru
      _
    %748 = vsyncpa [#allocation3], 1
    %749 = vsyncpa [#allocation6], 1
    %750 = vsyncpa [#allocation9], 1
    %751 = vsyncpa [#allocation4], 1

</llo_original>
